<compile_context>
chip_gen: v5e
topology: v5e:2x2
jax: 0.10.0
libtpu: 0.0.40
codegen_flags: <defaults>
</compile_context>

<pallas_src>
import functools
import math

import jax
import jax.numpy as jnp
from jax.experimental import pallas as pl
from jax.experimental.pallas import tpu as pltpu


# ----------------------------- Pallas kernels --------------------------------
def _pool_conv_sigmoid_kernel(w_ref, x_ref, attn_ref, acc_ref, *,
                              inv_hw, ksize, channels):
    """Fused global-avg-pool + k-tap cross-channel conv1d + sigmoid.

    w_ref:    (ksize,) f32 conv taps in SMEM
    x_ref:    (1, C, THW) tile of the spatially-flattened input
    attn_ref: (1, C, 1) output in x.dtype; resident across the reduction axis
    acc_ref:  (C + 2*pad, 1) f32 scratch; rows [pad, pad+C) hold the running
              spatial sum, edge rows stay zero (the conv's 'same' padding).
    """
    t = pl.program_id(1)
    pad = (ksize - 1) // 2

    @pl.when(t == 0)
    def _():
        acc_ref[...] = jnp.zeros_like(acc_ref)

    # Lane reduction keeps C on sublanes -> no relayout anywhere.
    psum = jnp.sum(x_ref[0].astype(jnp.float32), axis=-1, keepdims=True)  # (C,1)
    acc_ref[pl.ds(pad, channels), :] += psum

    @pl.when(t == pl.num_programs(1) - 1)
    def _():
        # k-tap conv as sublane-offset slice reads of the zero-padded sums.
        z = jnp.zeros((channels, 1), jnp.float32)
        for j in range(ksize):
            z = z + w_ref[j] * acc_ref[pl.ds(j, channels), :]
        z = z * inv_hw                                   # conv(mean) == conv(sum)/HW
        attn_ref[0] = (1.0 / (1.0 + jnp.exp(-z))).astype(attn_ref.dtype)


def _scale_kernel(x_ref, attn_ref, o_ref):
    """o = x * attn, broadcasting the (1, C, 1) attention over the lane dim."""
    o_ref[...] = x_ref[...] * attn_ref[...]


# ------------------------------- helpers --------------------------------------
def eca_kernel_size(channels, gamma=2, b=1):
    """Same formula as the PyTorch module __init__."""
    k = int(abs((math.log(channels, 2) + b) / gamma))
    return k if k % 2 else k + 1


def _target_block_bytes():
    """Target bytes for one (1, C, thw) block, generation-aware via VMEM size."""
    vmem_bytes = 64 * 1024 * 1024
    try:
        vmem_bytes = int(pltpu.get_tpu_info().vmem_capacity_bytes)
    except Exception:
        pass
    # Kernel B keeps ~4 blocks live (2 in + 2 out, double-buffered): keep that
    # well under physical VMEM with headroom for compiler-internal scratch.
    if vmem_bytes >= 96 * 1024 * 1024:      # v5e / v6e class (128 MiB VMEM)
        return 8 << 20
    return 5 << 20                          # v7x class (64 MiB VMEM)


def _pick_hw_tile(hw, row_bytes, target_bytes):
    """Multiple-of-128 lane tile for the flattened H*W axis (byte-based)."""
    max_t = max(128, (target_bytes // max(1, row_bytes)) // 128 * 128)
    if hw <= max_t:
        return hw                            # whole axis in one (legal) block
    t = max_t
    while t >= 128:
        if hw % t == 0:
            return t                         # largest 128-multiple divisor
        t -= 128
    return max_t                             # no divisor: wrapper pads hw


# ------------------------------- wrapper --------------------------------------
def ecanet_forward(x_nchw, conv_weight, *, donate_x=False):
    """ECANet.forward.  x_nchw: (N, C, H, W); conv_weight: (1, 1, k), no bias."""
    N, C, H, W = x_nchw.shape
    hw = H * W
    ksize = int(conv_weight.shape[-1])
    pad = (ksize - 1) // 2
    itemsize = x_nchw.dtype.itemsize

    x3 = x_nchw.reshape(N, C, hw)            # lane-dense view, no transpose

    thw = _pick_hw_tile(hw, C * itemsize, _target_block_bytes())
    hw_pad = hw if hw % thw == 0 else ((hw + thw - 1) // thw) * thw
    if hw_pad != hw:
        # Zero padding contributes 0 to the pooled sum; mean uses the true hw.
        x3 = jnp.pad(x3, ((0, 0), (0, 0), (0, hw_pad - hw)))
    grid = (N, hw_pad // thw)

    blk_bytes = C * thw * itemsize
    # Honest accounting: kernel A ~2x block (double-buffered input) + small
    # scratch; kernel B ~4x block (2 in + 2 out buffers); +2 MiB headroom.
    vmem_a = int(max(8 << 20, 2 * blk_bytes + (2 << 20)))
    vmem_b = int(max(8 << 20, 4 * blk_bytes + (2 << 20)))

    w_taps = conv_weight.reshape(-1).astype(jnp.float32)      # (ksize,)

    # ---- kernel A: fused pool + conv1d + sigmoid -> (N, C, 1) attention ------
    attn = pl.pallas_call(
        functools.partial(_pool_conv_sigmoid_kernel,
                          inv_hw=1.0 / hw, ksize=ksize, channels=C),
        out_shape=jax.ShapeDtypeStruct((N, C, 1), x_nchw.dtype),
        grid_spec=pltpu.PrefetchScalarGridSpec(
            num_scalar_prefetch=0,
            grid=grid,
            in_specs=[
                pl.BlockSpec(memory_space=pltpu.MemorySpace.SMEM),   # k taps
                pl.BlockSpec((1, C, thw), lambda b, t: (b, 0, t)),   # x tiles
            ],
            out_specs=pl.BlockSpec((1, C, 1), lambda b, t: (b, 0, 0)),
            scratch_shapes=[pltpu.VMEM((C + 2 * pad, 1), jnp.float32)],
        ),
        compiler_params=pltpu.CompilerParams(
            dimension_semantics=("parallel", "arbitrary"),
            vmem_limit_bytes=vmem_a,
        ),
    )(w_taps, x3)

    # ---- kernel B: broadcast-scale x by the channel attention ----------------
    out3 = pl.pallas_call(
        _scale_kernel,
        out_shape=jax.ShapeDtypeStruct((N, C, hw_pad), x_nchw.dtype),
        grid_spec=pltpu.PrefetchScalarGridSpec(
            num_scalar_prefetch=0,
            grid=grid,
            in_specs=[
                pl.BlockSpec((1, C, thw), lambda b, t: (b, 0, t)),
                pl.BlockSpec((1, C, 1), lambda b, t: (b, 0, 0)),
            ],
            out_specs=pl.BlockSpec((1, C, thw), lambda b, t: (b, 0, t)),
        ),
        compiler_params=pltpu.CompilerParams(
            dimension_semantics=("parallel", "parallel"),
            vmem_limit_bytes=vmem_b,
        ),
        input_output_aliases=({0: 0} if donate_x else {}),
    )(x3, attn)

    if hw_pad != hw:
        out3 = out3[:, :, :hw]
    return out3.reshape(N, C, H, W)


if __name__ == "__main__":
    # Small deterministic example.  C=16 so the ECA kernel-size formula gives
    # k=3 (a non-trivial cross-channel conv with zero-padded edges).
    N, C, H, W = 2, 16, 16, 16
    gamma, b = 2, 1
    ksize = eca_kernel_size(C, gamma, b)               # -> 3

    key = jax.random.PRNGKey(0)
    kx, kw = jax.random.split(key, 2)
    x = jax.random.normal(kx, (N, C, H, W), dtype=jnp.float32)
    conv_weight = jax.random.normal(kw, (1, 1, ksize), dtype=jnp.float32) * 0.5

    out = jax.block_until_ready(ecanet_forward(x, conv_weight))
    assert out.shape == (N, C, H, W), out.shape

    # Cross-check against a pure-JAX reference with identical semantics.
    pooled = jnp.mean(x, axis=(2, 3))                                   # (N, C)
    pad = (ksize - 1) // 2
    conv = jax.lax.conv_general_dilated(
        pooled[:, None, :], conv_weight,
        window_strides=(1,), padding=((pad, pad),),
        dimension_numbers=("NCH", "OIH", "NCH"))[:, 0, :]               # (N, C)
    ref = x * jax.nn.sigmoid(conv)[:, :, None, None]
    assert jnp.allclose(out, ref, atol=1e-5, rtol=1e-5), \
        float(jnp.max(jnp.abs(out - ref)))

    print("KERNEL_OK")
</pallas_src>

<mosaic_0001>
module attributes {stable_mosaic.version = 11 : i64} {
  func.func @_pool_conv_sigmoid_kernel(%arg0: i32, %arg1: i32, %arg2: memref<3xf32, #tpu.memory_space<smem>>, %arg3: memref<1x16x256xf32, #tpu.memory_space<vmem>>, %arg4: memref<1x16x1xf32, #tpu.memory_space<vmem>>, %arg5: memref<18x1xf32, #tpu.memory_space<vmem>>) attributes {dimension_semantics = [#tpu.dimension_semantics<parallel>, #tpu.dimension_semantics<arbitrary>], iteration_bounds = array<i64: 2, 1>, scalar_prefetch = 0 : i64, scratch_operands = 1 : i64, tpu.core_type = #tpu.core_type<tc>, window_params = [{transform_indices = @transform_0, window_bounds = array<i64: 3>}, {transform_indices = @transform_1, window_bounds = array<i64: 1, 16, 256>}, {transform_indices = @transform_2, window_bounds = array<i64: 1, 16, 1>}]} {
    %c0_i32 = arith.constant 0 : i32
    %0 = arith.cmpi eq, %arg1, %c0_i32 : i32
    %1 = arith.extui %0 : i1 to i32
    %c0_i32_0 = arith.constant 0 : i32
    %2 = arith.cmpi ne, %1, %c0_i32_0 : i32
    scf.if %2 {
      %cst_8 = arith.constant 0.000000e+00 : f32
      %13 = vector.broadcast %cst_8 : f32 to vector<18x1xf32>
      %c0_9 = arith.constant 0 : index
      %c0_10 = arith.constant 0 : index
      %14 = vector.load %arg5[%c0_9, %c0_10] : memref<18x1xf32, #tpu.memory_space<vmem>>, vector<18x1xf32>
      tpu.vector_store %arg5[%c0_9, %c0_10], %13 {strides = array<i32>} : memref<18x1xf32, #tpu.memory_space<vmem>>, vector<18x1xf32>,
    } else {
    }
    %c0 = arith.constant 0 : index
    %c0_1 = arith.constant 0 : index
    %c0_2 = arith.constant 0 : index
    %3 = vector.load %arg3[%c0, %c0_1, %c0_2] : memref<1x16x256xf32, #tpu.memory_space<vmem>>, vector<1x16x256xf32>
    %4 = vector.shape_cast %3 : vector<1x16x256xf32> to vector<16x256xf32>
    %cst = arith.constant dense<0.000000e+00> : vector<16xf32>
    %5 = vector.multi_reduction <add>, %4, %cst [1] : vector<16x256xf32> to vector<16xf32>
    %6 = vector.shape_cast %5 : vector<16xf32> to vector<16x1xf32>
    %c1 = arith.constant 1 : index
    %c0_3 = arith.constant 0 : index
    %7 = vector.load %arg5[%c1, %c0_3] : memref<18x1xf32, #tpu.memory_space<vmem>>, vector<16x1xf32>
    %8 = arith.addf %7, %6 : vector<16x1xf32>
    %c1_4 = arith.constant 1 : index
    %c0_5 = arith.constant 0 : index
    %9 = vector.load %arg5[%c1_4, %c0_5] : memref<18x1xf32, #tpu.memory_space<vmem>>, vector<16x1xf32>
    tpu.vector_store %arg5[%c1_4, %c0_5], %8 {strides = array<i32>} : memref<18x1xf32, #tpu.memory_space<vmem>>, vector<16x1xf32>,
    %c0_i32_6 = arith.constant 0 : i32
    %10 = arith.cmpi eq, %arg1, %c0_i32_6 : i32
    %11 = arith.extui %10 : i1 to i32
    %c0_i32_7 = arith.constant 0 : i32
    %12 = arith.cmpi ne, %11, %c0_i32_7 : i32
    scf.if %12 {
      %cst_8 = arith.constant 0.000000e+00 : f32
      %13 = vector.broadcast %cst_8 : f32 to vector<16x1xf32>
      %c0_9 = arith.constant 0 : index
      %14 = memref.load %arg2[%c0_9] : memref<3xf32, #tpu.memory_space<smem>>
      %c0_10 = arith.constant 0 : index
      %c0_11 = arith.constant 0 : index
      %15 = vector.load %arg5[%c0_10, %c0_11] : memref<18x1xf32, #tpu.memory_space<vmem>>, vector<16x1xf32>
      %16 = vector.broadcast %14 : f32 to vector<16x1xf32>
      %17 = arith.mulf %16, %15 : vector<16x1xf32>
      %18 = arith.addf %13, %17 : vector<16x1xf32>
      %c1_12 = arith.constant 1 : index
      %19 = memref.load %arg2[%c1_12] : memref<3xf32, #tpu.memory_space<smem>>
      %c1_13 = arith.constant 1 : index
      %c0_14 = arith.constant 0 : index
      %20 = vector.load %arg5[%c1_13, %c0_14] : memref<18x1xf32, #tpu.memory_space<vmem>>, vector<16x1xf32>
      %21 = vector.broadcast %19 : f32 to vector<16x1xf32>
      %22 = arith.mulf %21, %20 : vector<16x1xf32>
      %23 = arith.addf %18, %22 : vector<16x1xf32>
      %c2 = arith.constant 2 : index
      %24 = memref.load %arg2[%c2] : memref<3xf32, #tpu.memory_space<smem>>
      %c2_15 = arith.constant 2 : index
      %c0_16 = arith.constant 0 : index
      %25 = vector.load %arg5[%c2_15, %c0_16] : memref<18x1xf32, #tpu.memory_space<vmem>>, vector<16x1xf32>
      %26 = vector.broadcast %24 : f32 to vector<16x1xf32>
      %27 = arith.mulf %26, %25 : vector<16x1xf32>
      %28 = arith.addf %23, %27 : vector<16x1xf32>
      %cst_17 = arith.constant 3.906250e-03 : f32
      %29 = vector.broadcast %cst_17 : f32 to vector<16x1xf32>
      %30 = arith.mulf %28, %29 : vector<16x1xf32>
      %cst_18 = arith.constant 0.000000e+00 : f32
      %31 = vector.broadcast %cst_18 : f32 to vector<16x1xf32>
      %32 = arith.subf %31, %30 : vector<16x1xf32>
      %33 = math.exp %32 : vector<16x1xf32>
      %cst_19 = arith.constant 1.000000e+00 : f32
      %34 = vector.broadcast %cst_19 : f32 to vector<16x1xf32>
      %35 = arith.addf %34, %33 : vector<16x1xf32>
      %cst_20 = arith.constant 1.000000e+00 : f32
      %36 = vector.broadcast %cst_20 : f32 to vector<16x1xf32>
      %37 = arith.divf %36, %35 : vector<16x1xf32>
      %c0_21 = arith.constant 0 : index
      %c0_22 = arith.constant 0 : index
      %c0_23 = arith.constant 0 : index
      %38 = vector.load %arg4[%c0_21, %c0_22, %c0_23] : memref<1x16x1xf32, #tpu.memory_space<vmem>>, vector<1x16x1xf32>
      %39 = vector.shape_cast %38 : vector<1x16x1xf32> to vector<16x1xf32>
      %40 = vector.shape_cast %37 : vector<16x1xf32> to vector<1x16x1xf32>
      tpu.vector_store %arg4[%c0_21, %c0_22, %c0_23], %40 {strides = array<i32>} : memref<1x16x1xf32, #tpu.memory_space<vmem>>, vector<1x16x1xf32>,
    } else {
    }
    return
  }
  func.func @transform_0(%arg0: i32, %arg1: i32) -> i32 {
    %c0_i32 = arith.constant 0 : i32
    %c0_i32_0 = arith.constant 0 : i32
    return %c0_i32 : i32
  }
  func.func @transform_1(%arg0: i32, %arg1: i32) -> (i32, i32, i32) {
    %c0_i32 = arith.constant 0 : i32
    %c0_i32_0 = arith.constant 0 : i32
    return %arg0, %c0_i32, %arg1 : i32, i32, i32
  }
  func.func @transform_2(%arg0: i32, %arg1: i32) -> (i32, i32, i32) {
    %c0_i32 = arith.constant 0 : i32
    %c0_i32_0 = arith.constant 0 : i32
    %c0_i32_1 = arith.constant 0 : i32
    return %arg0, %c0_i32, %c0_i32_0 : i32, i32, i32
  }
}

</mosaic_0001>

<llo_original>
// kernel: tpu_custom_call.1
$region0: #{tpu_custom_call.1}
  #allocation0 [shape = 'u32[]', space=smem, size = 0x4, offset = 0x4, fixed_abs, tag = 'smem constant byte address 0x4 - core index']
  #allocation1 [shape = 'u32[72,128]{1,0:T(1,128)}', space=vmem, size = 0x9000, scoped, tag = 'internal scratch']
  #allocation2 [shape = 'f32[18,1]{1,0:T(8,128)}', space=vmem, size = 0x3000, scoped, tag = 'scratch operand']
  %s0 = inlined_call_operand.hbm [shape: f32[3], index: 0, kind: input, shape index: {}]
  %s1 = inlined_call_operand.hbm [shape: f32[2,16,256], index: 1, kind: input, shape index: {}]
  %s2 = inlined_call_operand.vmem [shape: f32[2,16,1], index: 2, kind: output, shape index: {}]
  %s3 = sld [smem:[#allocation0]]
  $region57: #{tpu_custom_call.1} parent=0
    _
  %s5 = ssub.s32 1, %s3
  %s6 = scalar_select 0, %s5, %s3
  $region1: #{tpu_custom_call.1} parent=0
    #allocation3 [shape = 'u8[512]{0}', space=smem, size = 0x200, scoped, tag = 'input window, operand 0, single buffered']
    #allocation4 [shape = 's32[2]{0}', space=sflag, size = 0x8, scoped, tag = 'scoped memory for tpu_custom_call.1']
    #allocation5 [shape = 's32[2]{0}', space=sflag, size = 0x8, scoped, tag = 'scoped memory for tpu_custom_call.1']
    #allocation6 [shape = 'u8[32768]{0}', space=vmem, size = 0x8000, scoped, tag = 'input window, operand 1']
    %7 = vsyncpa [#allocation5], 0
    %8 = vsyncpa [#allocation4], 0
    %s9 = scalar_lea.sflag [#allocation4], 1
    %10 = vsyncpa %s9, 0
    loop: start=0, step=1, limit=4
    $region2: #{tpu_custom_call.1} parent=1 // loop_pre_header
      _
    $region3: #{tpu_custom_call.1} parent=1 // loop_header
      %s12 = sphi 0, %s16
      %p13 = scmp.ge.s32.totalorder %s12, 4
      %s19 = sphi 0, %s31
      %s20 = sphi 0, %s27
      %s21 = sphi 0, %s19
      %s22 = sphi 0, %s20
      %s23 = sphi 0, %s21
      %s24 = sphi 0, %s22
      %s32 = sphi 0, %s32
      %s34 = sphi 0, %s32
      %s35 = sphi 0, %s34
      %s49 = sphi 0, %s35
      %s57 = sphi 0, %s59
      %s60 = sphi 0, %s57
      %s61 = sphi 0, %s60
      %s77 = sphi 0, %s61
      %s83 = sphi 0, %s85
      %s86 = sphi 0, %s83
      %s87 = sphi 0, %s86
      %s103 = sphi 0, %s87
    $region4: #{tpu_custom_call.1} parent=1 // loop_header_branch
      %15 = sbr.rel (%p13) target = $region8
    $region5: #{tpu_custom_call.1} parent=1 // loop_body
      %s17 = ssub.s32 %s12, 1
      %s18 = ssub.s32 %s12, 2
      %s25 = sadd.s32 1, %s20
      %p26 = scmp.ge.s32.totalorder %s25, 1
      %s27 = scalar_select %p26, 0, %s25
      %s28 = sadd.s32 1, %s19
      %s29 = scalar_select %p26, %s28, %s19
      %p30 = scmp.ge.s32.totalorder %s29, 2
      %s31 = scalar_select %p30, 0, %s29
      %s33 = sadd.s32 %s32, 1
      %p36 = scmp.eq.s32.totalorder %s12, 1
      %p37 = scmp.ne.s32.totalorder %s32, %s34
      %p38 = scmp.eq.s32.totalorder %s12, 0
      %p39 = por %p37, %p38
      %p40 = scmp.ne.s32.totalorder %s32, %s34
      %p41 = scmp.eq.s32.totalorder %s17, 1
      %p42 = por %p40, %p41
      %p43 = scmp.ne.s32.totalorder %s34, %s35
      %p44 = scmp.eq.s32.totalorder %s17, 0
      %p45 = por %p43, %p44
      %p46 = scmp.ne.s32.totalorder %s34, %s35
      %p47 = scmp.eq.s32.totalorder %s18, 1
      %p48 = por %p46, %p47
      %p50 = scmp.ne.s32.totalorder %s35, %s49
      %p51 = scmp.eq.s32.totalorder %s18, 0
      %p52 = por %p50, %p51
      %s53 = ssub.s32 %s19, %s31
      %s54 = ssub.s32 %s20, %s27
      %s55 = sor.u32 %s53, %s54
      %p56 = scmp.eq.s32.totalorder %s55, 0
      %s58 = sadd.s32 %s57, 1
      %s59 = scalar_select %p56, %s57, %s58
      %p62 = pneg %p56
      %p63 = scmp.eq.s32.totalorder %s12, 1
      %p64 = por %p62, %p63
      %p65 = scmp.ne.s32.totalorder %s57, %s60
      %p66 = scmp.eq.s32.totalorder %s12, 0
      %p67 = por %p65, %p66
      %p68 = scmp.ne.s32.totalorder %s57, %s60
      %p69 = scmp.eq.s32.totalorder %s17, 1
      %p70 = por %p68, %p69
      %p71 = scmp.ne.s32.totalorder %s60, %s61
      %p72 = scmp.eq.s32.totalorder %s17, 0
      %p73 = por %p71, %p72
      %p74 = scmp.ne.s32.totalorder %s60, %s61
      %p75 = scmp.eq.s32.totalorder %s18, 1
      %p76 = por %p74, %p75
      %p78 = scmp.ne.s32.totalorder %s61, %s77
      %p79 = scmp.eq.s32.totalorder %s18, 0
      %p80 = por %p78, %p79
      %s81 = ssub.s32 %s19, %s31
      %p82 = scmp.eq.s32.totalorder %s81, 0
      %s84 = sadd.s32 %s83, 1
      %s85 = scalar_select %p82, %s83, %s84
      %p88 = pneg %p82
      %p89 = scmp.eq.s32.totalorder %s12, 1
      %p90 = por %p88, %p89
      %p91 = scmp.ne.s32.totalorder %s83, %s86
      %p92 = scmp.eq.s32.totalorder %s12, 0
      %p93 = por %p91, %p92
      %p94 = scmp.ne.s32.totalorder %s83, %s86
      %p95 = scmp.eq.s32.totalorder %s17, 1
      %p96 = por %p94, %p95
      %p97 = scmp.ne.s32.totalorder %s86, %s87
      %p98 = scmp.eq.s32.totalorder %s17, 0
      %p99 = por %p97, %p98
      %p100 = scmp.ne.s32.totalorder %s86, %s87
      %p101 = scmp.eq.s32.totalorder %s18, 1
      %p102 = por %p100, %p101
      %p104 = scmp.ne.s32.totalorder %s87, %s103
      %p105 = scmp.eq.s32.totalorder %s18, 0
      %p106 = por %p104, %p105
      %p107 = scmp.le.s32.totalorder 1, %s12
      %p108 = scmp.lt.s32.totalorder %s12, 3
      %p109 = pnand %p107, %p108
      %p110 = pneg %p109
      // Predicated region
      $region9: #{tpu_custom_call.1} parent=5 // pred_check
        _
      $region10: #{tpu_custom_call.1} parent=5 // pred_check_branch
        %112 = sbr.rel (%p109) target = $region12
      $region11: #{tpu_custom_call.1} parent=5 // pred_region
        %s113 = ssub.s32 %s12, 1
        // Predicated region
        $region13: #{tpu_custom_call.1} parent=11 // pred_check
          %p114 = pneg %p45
        $region14: #{tpu_custom_call.1} parent=11 // pred_check_branch
          %116 = sbr.rel (%p114) target = $region16
        $region15: #{tpu_custom_call.1} parent=11 // pred_region
          %118 = vsyncadd [#allocation5], 0
          %s120 = sshll.u32 %s0, 4
          %s121 = int_to_ptr.hbm [resolvable:$true] %s120
          %123 = dma.hbm_to_smem %s121, 16, [#allocation3], [#allocation5]
        $region16: #{tpu_custom_call.1} parent=11 // pred_fallthru
          _
      $region12: #{tpu_custom_call.1} parent=5 // pred_fallthru
        _
      %p124 = scmp.lt.s32.totalorder %s12, 2
      // Predicated region
      $region17: #{tpu_custom_call.1} parent=5 // pred_check
        %p125 = pneg %p124
      $region18: #{tpu_custom_call.1} parent=5 // pred_check_branch
        %127 = sbr.rel (%p125) target = $region20
      $region19: #{tpu_custom_call.1} parent=5 // pred_region
        // Predicated region
        $region21: #{tpu_custom_call.1} parent=19 // pred_check
          %p128 = pneg %p67
        $region22: #{tpu_custom_call.1} parent=19 // pred_check_branch
          %130 = sbr.rel (%p128) target = $region24
        $region23: #{tpu_custom_call.1} parent=19 // pred_region
          %s131 = sand.u32 %s57, 1
          %s132 = scalar_lea.sflag [#allocation4], %s131
          %s133 = sand.u32 %s57, 1
          %s134 = smul.addr %s133, 32
          %s135 = scalar_lea.vmem [#allocation6], %s134
          %s136 = smul.u32 2, %s20
          %138 = vsyncadd %s132, 0
          %s139 = smul.addr %s19, 4
          %s140 = sadd.s32 %s136, %s139
          %s141 = smul.addr %s140, 8
          %s142 = scalar_lea.hbm %s1, %s141
          %s143 = sshll.u32 %s142, 4
          %s144 = int_to_ptr.hbm [resolvable:$true] %s143
          %s145 = sshll.u32 %s135, 4
          %s146 = int_to_ptr.vmem [resolvable:$true] %s145
          %151 = dma.hbm_to_vmem [thread:$0]  %s144, 512, %s146, %s132, 256, 256, 16
        $region24: #{tpu_custom_call.1} parent=19 // pred_fallthru
          _
      $region20: #{tpu_custom_call.1} parent=5 // pred_fallthru
        _
      %p152 = scmp.le.s32.totalorder 1, %s12
      %p153 = scmp.lt.s32.totalorder %s12, 3
      %p154 = pnand %p152, %p153
      %p155 = pneg %p154
      // Predicated region
      $region25: #{tpu_custom_call.1} parent=5 // pred_check
        _
      $region26: #{tpu_custom_call.1} parent=5 // pred_check_branch
        %157 = sbr.rel (%p154) target = $region28
      $region27: #{tpu_custom_call.1} parent=5 // pred_region
        %s158 = ssub.s32 %s12, 1
        // Predicated region
        $region29: #{tpu_custom_call.1} parent=27 // pred_check
          %p159 = pneg %p45
        $region30: #{tpu_custom_call.1} parent=27 // pred_check_branch
          %161 = sbr.rel (%p159) target = $region32
        $region31: #{tpu_custom_call.1} parent=27 // pred_region
          %163 = dma.done [#allocation5], 16
        $region32: #{tpu_custom_call.1} parent=27 // pred_fallthru
          _
        %s164 = sand.u32 %s60, 1
        %s165 = scalar_lea.sflag [#allocation4], %s164
        %s166 = sand.u32 %s60, 1
        %s167 = smul.addr %s166, 32
        %s168 = scalar_lea.vmem [#allocation6], %s167
        // Predicated region
        $region33: #{tpu_custom_call.1} parent=27 // pred_check
          %p169 = pneg %p73
        $region34: #{tpu_custom_call.1} parent=27 // pred_check_branch
          %171 = sbr.rel (%p169) target = $region36
        $region35: #{tpu_custom_call.1} parent=27 // pred_region
          %173 = dma.done %s165, 512
        $region36: #{tpu_custom_call.1} parent=27 // pred_fallthru
          _
        %174 = sfence
        %p175 = pneg %p45
        %p176 = pneg %p42
        %s177 = sand.u32 %s60, 1
        %s178 = scalar_lea.sflag [#allocation4], %s177
        %s179 = sand.u32 %s60, 1
        %s180 = smul.addr %s179, 32
        %s181 = scalar_lea.vmem [#allocation6], %s180
        %p182 = pneg %p73
        %p183 = pneg %p70
        %p184 = pneg %p99
        %p185 = pneg %p96
        %p186 = scmp.lt.s32.totalorder %s21, 1
        %s187 = scalar_select %p186, %s21, 1
        %s188 = smul.addr %s187, 2
        %s189 = smul.addr %s188, 8
        %s190 = scalar_lea.vmem %s2, %s189
        %s191 = smul.u32 2, %s22
        %p192 = scmp.lt.s32.totalorder %s21, 1
        %s193 = scalar_select %p192, %s21, 1
        %s194 = smul.addr %s193, 2
        %s195 = smul.addr %s194, 8
        %s196 = scalar_lea.vmem %s2, %s195
        %p197 = scmp.eq.s32.totalorder %s22, 0
        // Predicated region
        $region37: #{tpu_custom_call.1} parent=27 // pred_check
          %p198 = pneg %p197
        $region38: #{tpu_custom_call.1} parent=27 // pred_check_branch
          %200 = sbr.rel (%p198) target = $region40
        $region39: #{tpu_custom_call.1} parent=27 // pred_region
          %vm201 = vcmask 7168
          %202 = vst.msk [vmem:[#allocation2] sm:$0xff] %vm201, 0.0
          %203 = vst.msk [vmem:[#allocation2 + $0x8] sm:$0xff] %vm201, 0.0
          %vm204 = vcmask 1024
          %205 = vst.msk [vmem:[#allocation2 + $0x10] sm:$0x3] %vm204, 0.0
        $region40: #{tpu_custom_call.1} parent=27 // pred_fallthru
          _
        %v206 = vld [vmem:[%s168] sm:$0xff]
        %v207 = vld [vmem:[%s168 + $0x8] sm:$0xff]
        %v208 = vld [vmem:[%s168 + $0x10] sm:$0xff]
        %v209 = vld [vmem:[%s168 + $0x18] sm:$0xff]
        %v210 = vadd.f32 %v206, %v207
        %211 = vadd.xlane.f32.xlu0 %v210
        %v212 = vpop.xlane.xlu0 %211
        %v213 = vadd.f32 %v208, %v209
        %214 = vadd.xlane.f32.xlu0 %v213
        %v215 = vpop.xlane.xlu0 %214
        %v216 = vld [vmem:[#allocation2 + $0x1] sm:$0xff]
        %v217 = vld [vmem:[#allocation2 + $0x9] sm:$0xff]
        %v218 = vadd.f32 %v216, %v212
        %v219 = vadd.f32 %v217, %v215
        %vm220 = vcmask 7168
        %221 = vst.msk [vmem:[#allocation2 + $0x1] sm:$0xff] %vm220, %v218
        %222 = vst.msk [vmem:[#allocation2 + $0x9] sm:$0xff] %vm220, %v219
        // Predicated region
        $region41: #{tpu_custom_call.1} parent=27 // pred_check
          %p223 = pneg %p197
        $region42: #{tpu_custom_call.1} parent=27 // pred_check_branch
          %225 = sbr.rel (%p223) target = $region44
        $region43: #{tpu_custom_call.1} parent=27 // pred_region
          %s226 = sld [smem:[#allocation3]]
          %v227 = vld [vmem:[#allocation2] sm:$0xff]
          %v228 = vld [vmem:[#allocation2 + $0x8] sm:$0xff]
          %v229 = vstv %s226
          %v230 = vmul.f32 %v229, %v227
          %v231 = vmul.f32 %v229, %v228
          %v232 = vadd.f32 %v230, 0.0
          %v233 = vadd.f32 %v231, 0.0
          %s234 = sld [smem:[#allocation3 + $0x1]]
          %v235 = vld [vmem:[#allocation2 + $0x1] sm:$0xff]
          %v236 = vld [vmem:[#allocation2 + $0x9] sm:$0xff]
          %v237 = vstv %s234
          %v238 = vmul.f32 %v237, %v235
          %v239 = vmul.f32 %v237, %v236
          %v240 = vadd.f32 %v232, %v238
          %v241 = vadd.f32 %v233, %v239
          %s242 = sld [smem:[#allocation3 + $0x2]]
          %v243 = vld [vmem:[#allocation2 + $0x2] sm:$0xff]
          %v244 = vld [vmem:[#allocation2 + $0xa] sm:$0xff]
          %v245 = vstv %s242
          %v246 = vmul.f32 %v245, %v243
          %v247 = vmul.f32 %v245, %v244
          %v248 = vadd.f32 %v240, %v246
          %v249 = vadd.f32 %v241, %v247
          %v250 = vmul.f32 %v248, 0.00390625
          %v251 = vmul.f32 %v249, 0.00390625
          %v252 = vsub.f32 0.0, %v250
          %v253 = vsub.f32 0.0, %v251
          %v254 = vmul.f32 %v252, 1.442695
          %v255 = vpow.pop %v254
          %v256 = vmul.f32 %v253, 1.442695
          %v257 = vpow.pop %v256
          %v258 = vadd.f32 %v255, 1.0
          %v259 = vadd.f32 %v257, 1.0
          %v260 = vrcp.pop %v258
          %v261 = vmul.f32 %v258, %v260
          %v262 = vsub.f32 1.0, %v261
          %v263 = vmul.f32 %v260, %v262
          %v264 = vadd.f32 %v260, %v263
          %vm265 = vweird.f32 %v258
          %vm266 = vweird.f32 %v260
          %vm267 = vmor %vm265, %vm266
          %v268 = vsel %vm267, %v260, %v264
          %v269 = vand.u32 2147483647, %v258
          %vm270 = vcmp.eq.f32.partialorder %v269, 8.507059e+37
          %v271 = vand.u32 %v258, 2147483648
          %v272 = vor.u32 1.1754944e-38, %v271
          %v273 = vsel %vm270, %v272, %v268
          %v274 = vmul.f32 1.0, %v273
          %v275 = vrcp.pop %v259
          %v276 = vmul.f32 %v259, %v275
          %v277 = vsub.f32 1.0, %v276
          %v278 = vmul.f32 %v275, %v277
          %v279 = vadd.f32 %v275, %v278
          %vm280 = vweird.f32 %v259
          %vm281 = vweird.f32 %v275
          %vm282 = vmor %vm280, %vm281
          %v283 = vsel %vm282, %v275, %v279
          %v284 = vand.u32 2147483647, %v259
          %vm285 = vcmp.eq.f32.partialorder %v284, 8.507059e+37
          %v286 = vand.u32 %v259, 2147483648
          %v287 = vor.u32 1.1754944e-38, %v286
          %v288 = vsel %vm285, %v287, %v283
          %v289 = vmul.f32 1.0, %v288
          %290 = vst.msk [vmem:[%s196] sm:$0xff] %vm220, %v274
          %291 = vst.msk [vmem:[%s196 + $0x8] sm:$0xff] %vm220, %v289
        $region44: #{tpu_custom_call.1} parent=27 // pred_fallthru
          _
        %p292 = scmp.lt.s32.totalorder %s21, 1
        %s293 = scalar_select %p292, %s21, 1
        %s294 = smul.addr %s293, 2
        %s295 = smul.addr %s294, 8
        %s296 = scalar_lea.vmem %s2, %s295
        // Predicated region
        $region45: #{tpu_custom_call.1} parent=27 // pred_check
          %p297 = pneg %p96
        $region46: #{tpu_custom_call.1} parent=27 // pred_check_branch
          %299 = sbr.rel (%p297) target = $region48
        $region47: #{tpu_custom_call.1} parent=27 // pred_region
          _
        $region48: #{tpu_custom_call.1} parent=27 // pred_fallthru
          _
      $region28: #{tpu_custom_call.1} parent=5 // pred_fallthru
        _
      %p300 = scmp.le.s32.totalorder 2, %s12
      // Predicated region
      $region49: #{tpu_custom_call.1} parent=5 // pred_check
        %p301 = pneg %p300
      $region50: #{tpu_custom_call.1} parent=5 // pred_check_branch
        %303 = sbr.rel (%p301) target = $region52
      $region51: #{tpu_custom_call.1} parent=5 // pred_region
        %s304 = ssub.s32 %s12, 2
        // Predicated region
        $region53: #{tpu_custom_call.1} parent=51 // pred_check
          %p305 = pneg %p102
        $region54: #{tpu_custom_call.1} parent=51 // pred_check_branch
          %307 = sbr.rel (%p305) target = $region56
        $region55: #{tpu_custom_call.1} parent=51 // pred_region
          %p308 = scmp.lt.s32.totalorder %s23, 1
          %s309 = scalar_select %p308, %s23, 1
          %s310 = smul.addr %s309, 2
          %s311 = smul.addr %s310, 8
          %s312 = scalar_lea.vmem %s2, %s311
        $region56: #{tpu_custom_call.1} parent=51 // pred_fallthru
          _
      $region52: #{tpu_custom_call.1} parent=5 // pred_fallthru
        _
    $region6: #{tpu_custom_call.1} parent=1 // loop_footer
      %s16 = sadd.s32 1, %s12
    $region7: #{tpu_custom_call.1} parent=1 // loop_footer_branch
      %11 = sbr.rel target = $region3
    $region8: #{tpu_custom_call.1} parent=1 // loop_exit
      _
    %313 = vsyncpa [#allocation4], 1
    %s314 = scalar_lea.sflag [#allocation4], 1
    %315 = vsyncpa %s314, 1
    %316 = vsyncpa [#allocation5], 1
    %s317 = scalar_lea.sflag [#allocation5], 1
    %318 = vsyncpa %s317, 1

</llo_original>
